<compile_context>
chip_gen: v5e
topology: v5e:2x2
jax: 0.10.0
libtpu: 0.0.40
codegen_flags: <defaults>
</compile_context>

<pallas_src>
import jax
import jax.numpy as jnp
from jax.experimental import pallas as pl
from jax.experimental.pallas import tpu as pltpu


def _rope_angle_add_kernel(inv_freq_ref, row_ref, out_ref):
    # Block shapes:
    #   inv_freq_ref : (1, half)          resident, fetched once (constant map)
    #   row_ref      : (2, tile_s, half)  [cos(r*f); sin(r*f)], r in [0, tile_s)
    #   out_ref      : (2, tile_s, half)  [cos; sin] planes of this seq tile
    tile_s = out_ref.shape[1]

    # Base angle of this tile: (i * tile_s) * inv_freq  ->  (1, half).
    # Only 2*half transcendentals per grid step.
    base = (pl.program_id(0) * tile_s).astype(jnp.float32)
    base_angle = base * inv_freq_ref[...]
    cb = jnp.cos(base_angle)          # (1, half)
    sb = jnp.sin(base_angle)          # (1, half)

    cr = row_ref[0]                   # (tile_s, half)  cos of within-tile angle
    sr = row_ref[1]                   # (tile_s, half)  sin of within-tile angle

    # cos(A+B) = cA*cB - sA*sB ; sin(A+B) = sA*cB + cA*sB   (pure VPU work)
    out_ref[0] = (cb * cr - sb * sr).astype(out_ref.dtype)
    out_ref[1] = (sb * cr + cb * sr).astype(out_ref.dtype)


def rotary_embedding(seq_len: int, dim: int, *,
                     max_rows_per_tile: int = 8192,
                     out_dtype=jnp.float32):
    """Returns (cos, sin), each of shape (seq_len, dim // 2)."""
    half = dim // 2
    assert half >= 1, "dim must be >= 2"

    # Exactly the PyTorch buffer.
    inv_freq = 1.0 / (10000.0 ** (jnp.arange(half, dtype=jnp.float32) / half))

    # Tile the sequence axis.  If the whole table fits in one tile, the block
    # equals the full array (no (8,128) divisibility issue); otherwise use a
    # multiple-of-8 row tile and let Pallas clip the last partial block.
    if seq_len <= max_rows_per_tile:
        tile_s = seq_len
    else:
        tile_s = max(8, (max_rows_per_tile // 8) * 8)
    num_tiles = pl.cdiv(seq_len, tile_s)

    # Within-tile cos/sin table, built once by XLA outside the kernel
    # (O(tile_s*half) transcendentals, independent of seq_len).
    row_angle = jnp.arange(tile_s, dtype=jnp.float32)[:, None] * inv_freq[None, :]
    row_table = jnp.stack([jnp.cos(row_angle), jnp.sin(row_angle)], axis=0)
    inv_freq_2d = inv_freq.reshape(1, half)

    # Explicit scoped-VMEM budget: 2 buffers for the output block + 2 for the
    # resident row table (+ headroom), clamped so it is safe on v5e's 16 MiB
    # scoped default and v7x's 64 MiB physical VMEM.
    out_itemsize = jnp.dtype(out_dtype).itemsize
    out_block_bytes = 2 * tile_s * half * out_itemsize
    row_block_bytes = 2 * tile_s * half * 4
    vmem_limit = int(min(max(2 * (out_block_bytes + row_block_bytes) + (4 << 20),
                             16 << 20),
                         48 << 20))

    fused = pl.pallas_call(
        _rope_angle_add_kernel,
        out_shape=jax.ShapeDtypeStruct((2, seq_len, half), out_dtype),
        grid=(num_tiles,),
        in_specs=[
            pl.BlockSpec((1, half), lambda i: (0, 0)),            # inv_freq, resident
            pl.BlockSpec((2, tile_s, half), lambda i: (0, 0, 0)),  # row table, resident
        ],
        out_specs=pl.BlockSpec((2, tile_s, half), lambda i: (0, i, 0)),
        compiler_params=pltpu.CompilerParams(
            dimension_semantics=(pltpu.PARALLEL,),
            vmem_limit_bytes=vmem_limit,
        ),
        cost_estimate=pl.CostEstimate(
            flops=int(6 * seq_len * half + 2 * num_tiles * half),  # 4 mul + 2 add / elem
            transcendentals=int(2 * num_tiles * half),             # base-angle cos/sin only
            bytes_accessed=int(2 * seq_len * half * out_itemsize
                               + 2 * tile_s * half * 4 + 4 * half),
        ),
    )(inv_freq_2d, row_table)

    return fused[0], fused[1]


def _reference(seq_len: int, dim: int):
    half = dim // 2
    inv_freq = 1.0 / (10000.0 ** (jnp.arange(half, dtype=jnp.float32) / half))
    freqs = jnp.arange(seq_len, dtype=jnp.float32)[:, None] * inv_freq[None, :]
    return jnp.cos(freqs), jnp.sin(freqs)


if __name__ == "__main__":
    key = jax.random.PRNGKey(0)  # module takes no tensor inputs; kept for convention
    del key

    # Small shapes consistent with the module's forward: seq=8, hidden dim=32.
    seq_len, dim = 8, 32
    cos, sin = rotary_embedding(seq_len, dim)
    jax.block_until_ready((cos, sin))

    cos_ref, sin_ref = _reference(seq_len, dim)
    half = dim // 2
    assert cos.shape == (seq_len, half) and sin.shape == (seq_len, half)
    assert cos.dtype == jnp.float32 and sin.dtype == jnp.float32
    assert jnp.allclose(cos, cos_ref, atol=1e-5, rtol=1e-5)
    assert jnp.allclose(sin, sin_ref, atol=1e-5, rtol=1e-5)

    # Second case exercising the tiled / multi-block path with a partial last
    # block and a nonzero base angle (angle-addition path).
    seq_len2, dim2 = 40, 32
    cos2, sin2 = rotary_embedding(seq_len2, dim2, max_rows_per_tile=16)
    jax.block_until_ready((cos2, sin2))
    cos2_ref, sin2_ref = _reference(seq_len2, dim2)
    assert cos2.shape == (seq_len2, dim2 // 2)
    assert jnp.allclose(cos2, cos2_ref, atol=1e-5, rtol=1e-5)
    assert jnp.allclose(sin2, sin2_ref, atol=1e-5, rtol=1e-5)

    print("KERNEL_OK")
</pallas_src>

<mosaic_0001>
module attributes {stable_mosaic.version = 11 : i64} {
  func.func @_rope_angle_add_kernel(%arg0: i32, %arg1: memref<1x16xf32, #tpu.memory_space<vmem>>, %arg2: memref<2x8x16xf32, #tpu.memory_space<vmem>>, %arg3: memref<2x8x16xf32, #tpu.memory_space<vmem>>) attributes {dimension_semantics = [#tpu.dimension_semantics<parallel>], iteration_bounds = array<i64: 1>, scalar_prefetch = 0 : i64, scratch_operands = 0 : i64, tpu.core_type = #tpu.core_type<tc>, window_params = [{pipeline_mode = #tpu.pipeline_mode<synchronous>, transform_indices = @transform_0, window_bounds = array<i64: 1, 16>}, {pipeline_mode = #tpu.pipeline_mode<synchronous>, transform_indices = @transform_1, window_bounds = array<i64: 2, 8, 16>}, {transform_indices = @transform_2, window_bounds = array<i64: 2, 8, 16>}]} {
    %c8_i32 = arith.constant 8 : i32
    %0 = arith.muli %arg0, %c8_i32 : i32
    %1 = arith.sitofp %0 : i32 to f32
    %c0 = arith.constant 0 : index
    %c0_0 = arith.constant 0 : index
    %2 = vector.load %arg1[%c0, %c0_0] : memref<1x16xf32, #tpu.memory_space<vmem>>, vector<1x16xf32>
    %3 = vector.broadcast %1 : f32 to vector<1x16xf32>
    %4 = arith.mulf %3, %2 : vector<1x16xf32>
    %5 = math.cos %4 : vector<1x16xf32>
    %6 = math.sin %4 : vector<1x16xf32>
    %c0_1 = arith.constant 0 : index
    %c0_2 = arith.constant 0 : index
    %c0_3 = arith.constant 0 : index
    %7 = vector.load %arg2[%c0_1, %c0_2, %c0_3] : memref<2x8x16xf32, #tpu.memory_space<vmem>>, vector<1x8x16xf32>
    %8 = vector.shape_cast %7 : vector<1x8x16xf32> to vector<8x16xf32>
    %c1 = arith.constant 1 : index
    %c0_4 = arith.constant 0 : index
    %c0_5 = arith.constant 0 : index
    %9 = vector.load %arg2[%c1, %c0_4, %c0_5] : memref<2x8x16xf32, #tpu.memory_space<vmem>>, vector<1x8x16xf32>
    %10 = vector.shape_cast %9 : vector<1x8x16xf32> to vector<8x16xf32>
    %11 = vector.broadcast %5 : vector<1x16xf32> to vector<8x16xf32>
    %12 = arith.mulf %11, %8 : vector<8x16xf32>
    %13 = vector.broadcast %6 : vector<1x16xf32> to vector<8x16xf32>
    %14 = arith.mulf %13, %10 : vector<8x16xf32>
    %15 = arith.subf %12, %14 : vector<8x16xf32>
    %c0_6 = arith.constant 0 : index
    %c0_7 = arith.constant 0 : index
    %c0_8 = arith.constant 0 : index
    %16 = vector.load %arg3[%c0_6, %c0_7, %c0_8] : memref<2x8x16xf32, #tpu.memory_space<vmem>>, vector<1x8x16xf32>
    %17 = vector.shape_cast %16 : vector<1x8x16xf32> to vector<8x16xf32>
    %18 = vector.shape_cast %15 : vector<8x16xf32> to vector<1x8x16xf32>
    tpu.vector_store %arg3[%c0_6, %c0_7, %c0_8], %18 {strides = array<i32>} : memref<2x8x16xf32, #tpu.memory_space<vmem>>, vector<1x8x16xf32>,
    %19 = vector.broadcast %6 : vector<1x16xf32> to vector<8x16xf32>
    %20 = arith.mulf %19, %8 : vector<8x16xf32>
    %21 = vector.broadcast %5 : vector<1x16xf32> to vector<8x16xf32>
    %22 = arith.mulf %21, %10 : vector<8x16xf32>
    %23 = arith.addf %20, %22 : vector<8x16xf32>
    %c1_9 = arith.constant 1 : index
    %c0_10 = arith.constant 0 : index
    %c0_11 = arith.constant 0 : index
    %24 = vector.load %arg3[%c1_9, %c0_10, %c0_11] : memref<2x8x16xf32, #tpu.memory_space<vmem>>, vector<1x8x16xf32>
    %25 = vector.shape_cast %24 : vector<1x8x16xf32> to vector<8x16xf32>
    %26 = vector.shape_cast %23 : vector<8x16xf32> to vector<1x8x16xf32>
    tpu.vector_store %arg3[%c1_9, %c0_10, %c0_11], %26 {strides = array<i32>} : memref<2x8x16xf32, #tpu.memory_space<vmem>>, vector<1x8x16xf32>,
    return
  }
  func.func @transform_0(%arg0: i32) -> (i32, i32) {
    %c0_i32 = arith.constant 0 : i32
    %c0_i32_0 = arith.constant 0 : i32
    %c0_i32_1 = arith.constant 0 : i32
    return %c0_i32, %c0_i32_0 : i32, i32
  }
  func.func @transform_1(%arg0: i32) -> (i32, i32, i32) {
    %c0_i32 = arith.constant 0 : i32
    %c0_i32_0 = arith.constant 0 : i32
    %c0_i32_1 = arith.constant 0 : i32
    %c0_i32_2 = arith.constant 0 : i32
    return %c0_i32, %c0_i32_0, %c0_i32_1 : i32, i32, i32
  }
  func.func @transform_2(%arg0: i32) -> (i32, i32, i32) {
    %c0_i32 = arith.constant 0 : i32
    %c0_i32_0 = arith.constant 0 : i32
    %c0_i32_1 = arith.constant 0 : i32
    return %c0_i32, %arg0, %c0_i32_0 : i32, i32, i32
  }
}

</mosaic_0001>

<llo_original>
// kernel: tpu_custom_call.1
$region0: #{tpu_custom_call.1}
  #allocation0 [shape = 'u32[]', space=smem, size = 0x4, offset = 0x4, fixed_abs, tag = 'smem constant byte address 0x4 - core index']
  #allocation1 [shape = 'u32[72,128]{1,0:T(1,128)}', space=vmem, size = 0x9000, scoped, tag = 'internal scratch']
  %s0 = inlined_call_operand.hbm [shape: f32[1,16], index: 0, kind: input, shape index: {}]
  %s1 = inlined_call_operand.hbm [shape: f32[2,8,16], index: 1, kind: input, shape index: {}]
  %s2 = inlined_call_operand.hbm [shape: f32[2,8,16], index: 2, kind: output, shape index: {}]
  %s3 = sld [smem:[#allocation0]]
  $region26: #{tpu_custom_call.1} parent=0
    _
  %s5 = ssub.s32 1, %s3
  %s6 = scalar_select 0, %s5, %s3
  $region1: #{tpu_custom_call.1} parent=0
    #allocation2 [shape = 'u8[512]{0}', space=vmem, size = 0x400, scoped, tag = 'input window, operand 0, single buffered']
    #allocation3 [shape = 's32[1]{0}', space=sflag, size = 0x4, scoped, tag = 'scoped memory for tpu_custom_call.1']
    #allocation4 [shape = 's32[1]{0}', space=sflag, size = 0x4, scoped, tag = 'scoped memory for tpu_custom_call.1']
    #allocation5 [shape = 'u8[8192]{0}', space=vmem, size = 0x2000, scoped, tag = 'input window, operand 1, single buffered']
    #allocation6 [shape = 's32[1]{0}', space=sflag, size = 0x4, scoped, tag = 'scoped memory for tpu_custom_call.1']
    #allocation7 [shape = 'u8[8192]{0}', space=vmem, size = 0x2000, scoped, tag = 'output window, operand 0, single buffered']
    %7 = vsyncpa [#allocation3], 0
    %8 = vsyncpa [#allocation6], 0
    %9 = vsyncpa [#allocation4], 0
    // Predicated region
    $region2: #{tpu_custom_call.1} parent=1 // pred_check
      _
    $region3: #{tpu_custom_call.1} parent=1 // pred_check_branch
      %11 = sbr.rel (0) target = $region5
    $region4: #{tpu_custom_call.1} parent=1 // pred_region
      %13 = vsyncadd [#allocation3], 0
      %s15 = sshll.u32 %s0, 4
      %s16 = int_to_ptr.hbm [resolvable:$true] %s15
      %s17 = sshll.u32 [#allocation2], 4
      %s18 = int_to_ptr.vmem [resolvable:$true] %s17
      %20 = dma.hbm_to_vmem [thread:$0]  %s16, 16, %s18, [#allocation3]
    $region5: #{tpu_custom_call.1} parent=1 // pred_fallthru
      _
    // Predicated region
    $region6: #{tpu_custom_call.1} parent=1 // pred_check
      _
    $region7: #{tpu_custom_call.1} parent=1 // pred_check_branch
      %22 = sbr.rel (0) target = $region9
    $region8: #{tpu_custom_call.1} parent=1 // pred_region
      %24 = vsyncadd [#allocation6], 0
      %s25 = sshll.u32 %s1, 4
      %s26 = int_to_ptr.hbm [resolvable:$true] %s25
      %s27 = sshll.u32 [#allocation5], 4
      %s28 = int_to_ptr.vmem [resolvable:$true] %s27
      %33 = dma.hbm_to_vmem [thread:$0]  %s26, 256, %s28, [#allocation6], 128, 128, 8
    $region9: #{tpu_custom_call.1} parent=1 // pred_fallthru
      _
    // Predicated region
    $region10: #{tpu_custom_call.1} parent=1 // pred_check
      _
    $region11: #{tpu_custom_call.1} parent=1 // pred_check_branch
      %35 = sbr.rel (0) target = $region13
    $region12: #{tpu_custom_call.1} parent=1 // pred_region
      %37 = dma.done [#allocation3], 16
    $region13: #{tpu_custom_call.1} parent=1 // pred_fallthru
      _
    // Predicated region
    $region14: #{tpu_custom_call.1} parent=1 // pred_check
      _
    $region15: #{tpu_custom_call.1} parent=1 // pred_check_branch
      %39 = sbr.rel (0) target = $region17
    $region16: #{tpu_custom_call.1} parent=1 // pred_region
      %41 = dma.done [#allocation6], 256
    $region17: #{tpu_custom_call.1} parent=1 // pred_fallthru
      _
    %s42 = smul.u32 0, 8
    %s43 = scvt.s32.f32 %s42
    %v44 = vld [vmem:[#allocation2] sm:$0x1]
    %v45 = vstv %s43
    %v46 = vmul.f32 %v45, %v44
    %v47 = vand.u32 2147483647, %v46
    %vm48 = vcmp.le.f32.partialorder %v47, 0.7853982
    %vm49 = vcmp.lt.s32.totalorder %v46, 0
    %v50 = vand.u32 %v46, 2139095040
    %v51 = vshrl.u32 %v50, 23
    %v52 = vsub.s32 %v51, 127
    %v53 = vand.u32 2147483647, %v46
    %v54 = vand.u32 %v53, 8388607
    %v55 = vor.u32 %v54, 8388608
    %v56 = vsub.s32 0, %v55
    %v57 = vadd.s32 %v52, 1
    %vm58 = vcmp.gt.s32.totalorder %v57, 0
    %v59 = vsel %vm58, %v57, 0
    %v60 = vshrl.u32 %v59, 5
    %v61 = vand.u32 %v59, 31
    %v62 = vsub.s32 32, %v61
    %v63 = vshrl.u32 683565275, %v62
    %v64 = vshll.u32 683565275, %v61
    %v65 = vshrl.u32 2475754826, %v62
    %v66 = vor.u32 %v64, %v65
    %v67 = vshll.u32 2475754826, %v61
    %v68 = vshrl.u32 2131351028, %v62
    %v69 = vor.u32 %v67, %v68
    %v70 = vshll.u32 2131351028, %v61
    %v71 = vshrl.u32 2102212464, %v62
    %v72 = vor.u32 %v70, %v71
    %v73 = vshll.u32 2102212464, %v61
    %v74 = vshrl.u32 920167782, %v62
    %v75 = vor.u32 %v73, %v74
    %v76 = vshll.u32 920167782, %v61
    %v77 = vshrl.u32 1326507024, %v62
    %v78 = vor.u32 %v76, %v77
    %vm79 = vcmp.lt.s32.totalorder %v60, 1
    %vm80 = vcmp.lt.s32.totalorder %v60, 2
    %vm81 = vcmp.lt.s32.totalorder %v60, 3
    %vm82 = vcmp.lt.s32.totalorder %v60, 4
    %v83 = vsel %vm79, %v63, %v66
    %v84 = vsel %vm82, %v72, 2102212464
    %v85 = vsel %vm81, %v69, %v84
    %v86 = vsel %vm80, %v83, %v85
    %v87 = vsel %vm79, %v66, %v69
    %v88 = vsel %vm82, %v75, 920167782
    %v89 = vsel %vm81, %v72, %v88
    %v90 = vsel %vm80, %v87, %v89
    %v91 = vsel %vm79, %v69, %v72
    %v92 = vsel %vm82, %v78, 1326507024
    %v93 = vsel %vm81, %v75, %v92
    %v94 = vsel %vm80, %v91, %v93
    %v95 = vshll.u32 %v55, 8
    %v96 = vand.u32 %v95, 65535
    %v97 = vshrl.u32 %v95, 16
    %v98 = vand.u32 %v94, 65535
    %v99 = vshrl.u32 %v94, 16
    %v100 = vmul.u32 %v96, %v98
    %v101 = vmul.u32 %v96, %v99
    %v102 = vmul.u32 %v97, %v98
    %v103 = vmul.u32 %v97, %v99
    %v104 = vshll.u32 %v101, 16
    %v105 = vshrl.u32 %v101, 16
    %v106 = vshll.u32 %v102, 16
    %v107 = vshrl.u32 %v102, 16
    %vm108 = vc.u32 %v100, %v104
    %v109 = vsel %vm108, 1, 0
    %v110 = vadd.s32 %v100, %v104
    %v111 = vadd.s32 %v103, %v109
    %vm112 = vc.u32 %v110, %v106
    %v113 = vsel %vm112, 1, 0
    %v114 = vadd.s32 %v110, %v106
    %v115 = vadd.s32 %v111, %v113
    %v116 = vadd.s32 %v115, %v105
    %v117 = vadd.s32 %v116, %v107
    %v118 = vand.u32 %v95, 65535
    %v119 = vshrl.u32 %v95, 16
    %v120 = vand.u32 %v90, 65535
    %v121 = vshrl.u32 %v90, 16
    %v122 = vmul.u32 %v118, %v120
    %v123 = vmul.u32 %v118, %v121
    %v124 = vmul.u32 %v119, %v120
    %v125 = vmul.u32 %v119, %v121
    %v126 = vshll.u32 %v123, 16
    %v127 = vshrl.u32 %v123, 16
    %v128 = vshll.u32 %v124, 16
    %v129 = vshrl.u32 %v124, 16
    %vm130 = vc.u32 %v122, %v126
    %v131 = vsel %vm130, 1, 0
    %v132 = vadd.s32 %v122, %v126
    %v133 = vadd.s32 %v125, %v131
    %vm134 = vc.u32 %v132, %v128
    %v135 = vsel %vm134, 1, 0
    %v136 = vadd.s32 %v132, %v128
    %v137 = vadd.s32 %v133, %v135
    %v138 = vadd.s32 %v137, %v127
    %v139 = vadd.s32 %v138, %v129
    %v140 = vmul.u32 %v95, %v86
    %v141 = vadd.s32 %v117, %v136
    %vm142 = vc.u32 %v117, %v136
    %v143 = vadd.s32 %v139, 1
    %v144 = vsel %vm142, %v143, %v139
    %v145 = vadd.s32 %v140, %v144
    %v146 = vadd.s32 %v145, 536870912
    %v147 = vshrl.u32 %v146, 30
    %v148 = vshll.u32 %v147, 30
    %v149 = vsub.s32 %v145, %v148
    %vm150 = vcmp.lt.s32.totalorder %v149, 0
    %v151 = vsub.s32 0, %v149
    %v152 = vsel %vm150, %v151, %v149
    %v153 = vclz %v152
    %v154 = vsub.s32 %v153, 2
    %vm155 = vcmp.gt.s32.totalorder 0, %v154
    %v156 = vsel %vm155, 0, %v154
    %v157 = vsub.s32 32, %v156
    %v158 = vshll.u32 %v149, %v156
    %v159 = vshrl.u32 %v141, %v157
    %v160 = vor.u32 %v158, %v159
    %v161 = vsub.s32 4294967266, %v156
    %v162 = vadd.s32 %v161, 127
    %v163 = vshll.u32 %v162, 23
    %v164 = vor.u32 4788187, %v163
    %v165 = vand.u32 2147483647, %v164
    %v167 = vcvt.s32.f32 %v160
    %v168 = vmul.f32 %v167, %v165
    %v169 = vxor.u32 %v168, 2147483648
    %v170 = vsel %vm49, %v169, %v168
    %v171 = vsub.s32 4, %v147
    %v172 = vsel %vm49, %v171, %v147
    %v173 = vsel %vm48, %v46, %v170
    %v174 = vsel %vm48, 0, %v172
    %v175 = vmul.f32 %v173, %v173
    %v176 = vmul.f32 %v175, -0.001358992
    %v177 = vadd.f32 %v176, 0.041655596
    %v178 = vmul.f32 %v175, %v177
    %v179 = vadd.f32 %v178, -0.4999988
    %v180 = vmul.f32 %v175, %v179
    %v181 = vadd.f32 1.0, %v180
    %v182 = vmul.f32 %v173, %v173
    %v183 = vmul.f32 %v182, -0.00019511016
    %v184 = vadd.f32 %v183, 0.008332121
    %v185 = vmul.f32 %v182, %v184
    %v186 = vadd.f32 %v185, -0.16666654
    %v187 = vmul.f32 %v182, %v186
    %v188 = vadd.f32 %v187, 1.0
    %v189 = vmul.f32 %v188, %v173
    %vm190 = vweird.f32 %v46
    %v191 = vand.u32 %v174, 3
    %vm192 = vcmp.lt.s32.totalorder %v191, 2
    %vm193 = vcmp.eq.s32.totalorder %v191, 0
    %v194 = vxor.u32 %v189, 2147483648
    %v195 = vsel %vm193, %v181, %v194
    %vm196 = vcmp.eq.s32.totalorder %v191, 2
    %v197 = vxor.u32 %v181, 2147483648
    %v198 = vsel %vm196, %v197, %v189
    %v199 = vsel %vm192, %v195, %v198
    %v200 = vsel %vm190, nan, %v199
    %v201 = vand.u32 2147483647, %v46
    %vm202 = vcmp.le.f32.partialorder %v201, 0.7853982
    %vm203 = vcmp.lt.s32.totalorder %v46, 0
    %v204 = vand.u32 %v46, 2139095040
    %v205 = vshrl.u32 %v204, 23
    %v206 = vsub.s32 %v205, 127
    %v207 = vand.u32 2147483647, %v46
    %v208 = vand.u32 %v207, 8388607
    %v209 = vor.u32 %v208, 8388608
    %v210 = vsub.s32 0, %v209
    %v211 = vadd.s32 %v206, 1
    %vm212 = vcmp.gt.s32.totalorder %v211, 0
    %v213 = vsel %vm212, %v211, 0
    %v214 = vshrl.u32 %v213, 5
    %v215 = vand.u32 %v213, 31
    %v216 = vsub.s32 32, %v215
    %v217 = vshrl.u32 683565275, %v216
    %v218 = vshll.u32 683565275, %v215
    %v219 = vshrl.u32 2475754826, %v216
    %v220 = vor.u32 %v218, %v219
    %v221 = vshll.u32 2475754826, %v215
    %v222 = vshrl.u32 2131351028, %v216
    %v223 = vor.u32 %v221, %v222
    %v224 = vshll.u32 2131351028, %v215
    %v225 = vshrl.u32 2102212464, %v216
    %v226 = vor.u32 %v224, %v225
    %v227 = vshll.u32 2102212464, %v215
    %v228 = vshrl.u32 920167782, %v216
    %v229 = vor.u32 %v227, %v228
    %v230 = vshll.u32 920167782, %v215
    %v231 = vshrl.u32 1326507024, %v216
    %v232 = vor.u32 %v230, %v231
    %vm233 = vcmp.lt.s32.totalorder %v214, 1
    %vm234 = vcmp.lt.s32.totalorder %v214, 2
    %vm235 = vcmp.lt.s32.totalorder %v214, 3
    %vm236 = vcmp.lt.s32.totalorder %v214, 4
    %v237 = vsel %vm233, %v217, %v220
    %v238 = vsel %vm236, %v226, 2102212464
    %v239 = vsel %vm235, %v223, %v238
    %v240 = vsel %vm234, %v237, %v239
    %v241 = vsel %vm233, %v220, %v223
    %v242 = vsel %vm236, %v229, 920167782
    %v243 = vsel %vm235, %v226, %v242
    %v244 = vsel %vm234, %v241, %v243
    %v245 = vsel %vm233, %v223, %v226
    %v246 = vsel %vm236, %v232, 1326507024
    %v247 = vsel %vm235, %v229, %v246
    %v248 = vsel %vm234, %v245, %v247
    %v249 = vshll.u32 %v209, 8
    %v250 = vand.u32 %v249, 65535
    %v251 = vshrl.u32 %v249, 16
    %v252 = vand.u32 %v248, 65535
    %v253 = vshrl.u32 %v248, 16
    %v254 = vmul.u32 %v250, %v252
    %v255 = vmul.u32 %v250, %v253
    %v256 = vmul.u32 %v251, %v252
    %v257 = vmul.u32 %v251, %v253
    %v258 = vshll.u32 %v255, 16
    %v259 = vshrl.u32 %v255, 16
    %v260 = vshll.u32 %v256, 16
    %v261 = vshrl.u32 %v256, 16
    %vm262 = vc.u32 %v254, %v258
    %v263 = vsel %vm262, 1, 0
    %v264 = vadd.s32 %v254, %v258
    %v265 = vadd.s32 %v257, %v263
    %vm266 = vc.u32 %v264, %v260
    %v267 = vsel %vm266, 1, 0
    %v268 = vadd.s32 %v264, %v260
    %v269 = vadd.s32 %v265, %v267
    %v270 = vadd.s32 %v269, %v259
    %v271 = vadd.s32 %v270, %v261
    %v272 = vand.u32 %v249, 65535
    %v273 = vshrl.u32 %v249, 16
    %v274 = vand.u32 %v244, 65535
    %v275 = vshrl.u32 %v244, 16
    %v276 = vmul.u32 %v272, %v274
    %v277 = vmul.u32 %v272, %v275
    %v278 = vmul.u32 %v273, %v274
    %v279 = vmul.u32 %v273, %v275
    %v280 = vshll.u32 %v277, 16
    %v281 = vshrl.u32 %v277, 16
    %v282 = vshll.u32 %v278, 16
    %v283 = vshrl.u32 %v278, 16
    %vm284 = vc.u32 %v276, %v280
    %v285 = vsel %vm284, 1, 0
    %v286 = vadd.s32 %v276, %v280
    %v287 = vadd.s32 %v279, %v285
    %vm288 = vc.u32 %v286, %v282
    %v289 = vsel %vm288, 1, 0
    %v290 = vadd.s32 %v286, %v282
    %v291 = vadd.s32 %v287, %v289
    %v292 = vadd.s32 %v291, %v281
    %v293 = vadd.s32 %v292, %v283
    %v294 = vmul.u32 %v249, %v240
    %v295 = vadd.s32 %v271, %v290
    %vm296 = vc.u32 %v271, %v290
    %v297 = vadd.s32 %v293, 1
    %v298 = vsel %vm296, %v297, %v293
    %v299 = vadd.s32 %v294, %v298
    %v300 = vadd.s32 %v299, 536870912
    %v301 = vshrl.u32 %v300, 30
    %v302 = vshll.u32 %v301, 30
    %v303 = vsub.s32 %v299, %v302
    %vm304 = vcmp.lt.s32.totalorder %v303, 0
    %v305 = vsub.s32 0, %v303
    %v306 = vsel %vm304, %v305, %v303
    %v307 = vclz %v306
    %v308 = vsub.s32 %v307, 2
    %vm309 = vcmp.gt.s32.totalorder 0, %v308
    %v310 = vsel %vm309, 0, %v308
    %v311 = vsub.s32 32, %v310
    %v312 = vshll.u32 %v303, %v310
    %v313 = vshrl.u32 %v295, %v311
    %v314 = vor.u32 %v312, %v313
    %v315 = vsub.s32 4294967266, %v310
    %v316 = vadd.s32 %v315, 127
    %v317 = vshll.u32 %v316, 23
    %v318 = vor.u32 4788187, %v317
    %v319 = vand.u32 2147483647, %v318
    %v321 = vcvt.s32.f32 %v314
    %v322 = vmul.f32 %v321, %v319
    %v323 = vxor.u32 %v322, 2147483648
    %v324 = vsel %vm203, %v323, %v322
    %v325 = vsub.s32 4, %v301
    %v326 = vsel %vm203, %v325, %v301
    %v327 = vsel %vm202, %v46, %v324
    %v328 = vsel %vm202, 0, %v326
    %v329 = vmul.f32 %v327, %v327
    %v330 = vmul.f32 %v329, -0.001358992
    %v331 = vadd.f32 %v330, 0.041655596
    %v332 = vmul.f32 %v329, %v331
    %v333 = vadd.f32 %v332, -0.4999988
    %v334 = vmul.f32 %v329, %v333
    %v335 = vadd.f32 1.0, %v334
    %v336 = vmul.f32 %v327, %v327
    %v337 = vmul.f32 %v336, -0.00019511016
    %v338 = vadd.f32 %v337, 0.008332121
    %v339 = vmul.f32 %v336, %v338
    %v340 = vadd.f32 %v339, -0.16666654
    %v341 = vmul.f32 %v336, %v340
    %v342 = vadd.f32 %v341, 1.0
    %v343 = vmul.f32 %v342, %v327
    %vm344 = vweird.f32 %v46
    %v345 = vadd.s32 %v328, 3
    %v346 = vand.u32 %v345, 3
    %vm347 = vcmp.lt.s32.totalorder %v346, 2
    %vm348 = vcmp.eq.s32.totalorder %v346, 0
    %v349 = vxor.u32 %v343, 2147483648
    %v350 = vsel %vm348, %v335, %v349
    %vm351 = vcmp.eq.s32.totalorder %v346, 2
    %v352 = vxor.u32 %v335, 2147483648
    %v353 = vsel %vm351, %v352, %v343
    %v354 = vsel %vm347, %v350, %v353
    %v355 = vsel %vm344, nan, %v354
    %v356 = vld [vmem:[#allocation5] sm:$0xff]
    %s357 = scalar_lea.vmem [#allocation5], 8
    %v358 = vld [vmem:[%s357] sm:$0xff]
    %v360 = vperm.slane %v200, 0
    %v362 = vmul.f32 %v360, %v356
    %v364 = vperm.slane %v355, 0
    %v366 = vmul.f32 %v364, %v358
    %v367 = vsub.f32 %v362, %v366
    %vm368 = vcmask 130048
    %369 = vst.msk [vmem:[#allocation7] sm:$0xff] %vm368, %v367
    %v370 = vmul.f32 %v364, %v356
    %v371 = vmul.f32 %v360, %v358
    %v372 = vadd.f32 %v370, %v371
    %s373 = scalar_lea.vmem [#allocation7], 8
    %374 = vst.msk [vmem:[%s373] sm:$0xff] %vm368, %v372
    // Predicated region
    $region18: #{tpu_custom_call.1} parent=1 // pred_check
      _
    $region19: #{tpu_custom_call.1} parent=1 // pred_check_branch
      %376 = sbr.rel (0) target = $region21
    $region20: #{tpu_custom_call.1} parent=1 // pred_region
      %378 = vsyncadd [#allocation4], 0
      %s379 = sshll.u32 [#allocation7], 4
      %s380 = int_to_ptr.vmem [resolvable:$true] %s379
      %s381 = sshll.u32 %s2, 4
      %s382 = int_to_ptr.hbm [resolvable:$true] %s381
      %387 = dma.vmem_to_hbm [thread:$0]  %s380, 256, %s382, [#allocation4], 128, 128, 8
    $region21: #{tpu_custom_call.1} parent=1 // pred_fallthru
      _
    // Predicated region
    $region22: #{tpu_custom_call.1} parent=1 // pred_check
      _
    $region23: #{tpu_custom_call.1} parent=1 // pred_check_branch
      %389 = sbr.rel (0) target = $region25
    $region24: #{tpu_custom_call.1} parent=1 // pred_region
      %391 = dma.done [#allocation4], 256
    $region25: #{tpu_custom_call.1} parent=1 // pred_fallthru
      _
    %392 = vsyncpa [#allocation3], 1
    %393 = vsyncpa [#allocation6], 1
    %394 = vsyncpa [#allocation4], 1

</llo_original>
